<compile_context>
chip_gen: v5e
topology: v5e:2x2
jax: 0.10.0
libtpu: 0.0.40
codegen_flags: <defaults>
</compile_context>

<pallas_src>
from functools import partial

import jax
import jax.numpy as jnp
from jax.experimental import pallas as pl
from jax.experimental.pallas import tpu as pltpu

LANE = 128


def _round_up(x, m):
    return (x + m - 1) // m * m


def _vmem_limit_bytes(estimate):
    """Scoped-VMEM limit: generation capacity with 20% headroom, >= estimate."""
    try:
        cap = int(pltpu.get_tpu_info().vmem_capacity_bytes)
    except Exception:
        cap = 64 * 1024 * 1024          # conservative fallback (v7x per-TC)
    return min(int(cap * 0.8), max(32 * 1024 * 1024, 2 * int(estimate)))


# ----------------------------------------------------------------------------
# Kernels
# ----------------------------------------------------------------------------
def _gemm_kernel(x_ref, w_ref, b_ref, o_ref, *, tile_ho, Wo):
    """Small-Cin path: one matmul per band (receptive field folded into lanes).

    x_ref: (1, tile_ho, Wo, CKK)   im2col slab for this band
    w_ref: (CKK, Cout_p)           BN scale pre-folded
    b_ref: (1, Cout_p)             folded BN bias (f32)
    o_ref: (1, tile_ho, Wo, Cout_p)
    """
    CKK = x_ref.shape[-1]
    Cout_p = o_ref.shape[-1]
    x = x_ref[0].reshape(tile_ho * Wo, CKK)
    acc = jnp.dot(x, w_ref[...], preferred_element_type=jnp.float32)
    y = acc + b_ref[...]                       # epilogue bias add, f32
    o_ref[0] = y.reshape(tile_ho, Wo, Cout_p).astype(o_ref.dtype)


def _direct_kernel(x_ref, w_ref, b_ref, o_ref, *, K, stride, dilation,
                   tile_ho, Wo):
    """Large-Cin path: K*K shifted matmuls over a halo band; vreg accumulator.

    x_ref: (1, band_h, Wp, Cin_p)   overlapping input band for this tile
    w_ref: (K, K, Cin_p, Cout_p)    BN scale pre-folded
    b_ref: (1, Cout_p)
    o_ref: (1, tile_ho, Wo, Cout_p)
    """
    Cin_p = x_ref.shape[-1]
    Cout_p = o_ref.shape[-1]
    acc = None
    for kh in range(K):
        for kw in range(K):
            if stride == 1:
                xs = x_ref[0, pl.ds(kh * dilation, tile_ho),
                           pl.ds(kw * dilation, Wo), :]
            else:
                # TODO(synk): stride>1 strided ref reads are not exercised by
                # the self-check below (stride>1 is routed to the GEMM path
                # there); kept for large-Cin downsampling layers.
                xs = x_ref[0, pl.ds(kh * dilation, tile_ho, stride),
                           pl.ds(kw * dilation, Wo, stride), :]
            p = jnp.dot(xs.reshape(tile_ho * Wo, Cin_p), w_ref[kh, kw],
                        preferred_element_type=jnp.float32)
            acc = p if acc is None else acc + p
    y = acc + b_ref[...]
    o_ref[0] = y.reshape(tile_ho, Wo, Cout_p).astype(o_ref.dtype)


# ----------------------------------------------------------------------------
# Wrapper
# ----------------------------------------------------------------------------
def conv2d_bn(x_nchw, weight_oihw, gamma, beta, running_mean, running_var, *,
              stride=1, pad=0, dilation=1, eps=1e-5, tile_ho=None,
              compute_dtype=None, out_dtype=None):
    """Forward of Conv2d_BN (groups=1, bias=False, act=Identity), eval-mode BN.

    x_nchw:       (N, Cin, H, W)   PyTorch layout
    weight_oihw:  (Cout, Cin, K, K)
    compute_dtype: optional MXU input dtype (e.g. jnp.bfloat16); accumulation
                   and the bias epilogue stay f32.
    returns:      (N, Cout, Ho, Wo)
    """
    N, Cin, H, W = x_nchw.shape
    Cout, Cin_w, K, K2 = weight_oihw.shape
    assert Cin_w == Cin and K == K2, "only groups=1 supported"

    Keff = (K - 1) * dilation + 1
    Ho = (H + 2 * pad - Keff) // stride + 1
    Wo = (W + 2 * pad - Keff) // stride + 1
    assert Ho > 0 and Wo > 0

    out_dtype = out_dtype or x_nchw.dtype
    cdt = compute_dtype or x_nchw.dtype

    # ---- row-tile size: tile_ho*Wo ~ 256, >= 2 tiles when batch == 1 ----
    if tile_ho is None:
        tile_ho = max(1, -(-256 // Wo))
    tile_ho = max(1, min(tile_ho, Ho))
    tiles_h = -(-Ho // tile_ho)
    if N * tiles_h < 2 and Ho > 1:          # keep both TensorCores busy
        tile_ho = -(-Ho // 2)
        tiles_h = -(-Ho // tile_ho)
    Ho_pad = tiles_h * tile_ho

    # ---- fold BN (eval) scale into the conv weights; bias applied in kernel ----
    inv_std = 1.0 / jnp.sqrt(running_var.astype(jnp.float32) + eps)
    scale = gamma.astype(jnp.float32) * inv_std                          # (Cout,)
    bias = beta.astype(jnp.float32) - running_mean.astype(jnp.float32) * scale
    w_hwio = jnp.transpose(weight_oihw, (2, 3, 1, 0)).astype(jnp.float32) * scale

    Cout_p = _round_up(Cout, LANE)
    bias_p = jnp.pad(bias, (0, Cout_p - Cout)).reshape(1, Cout_p)

    # ---- NCHW -> NHWC, zero-pad spatially to the exact extents needed ----
    Hneed = (Ho_pad - 1) * stride + Keff
    Wneed = (Wo - 1) * stride + Keff
    x = jnp.transpose(x_nchw, (0, 2, 3, 1))
    xp = jnp.pad(x, ((0, 0), (pad, pad), (pad, pad), (0, 0)))
    H2, W2 = H + 2 * pad, W + 2 * pad
    if Hneed > H2:
        xp = jnp.pad(xp, ((0, 0), (0, Hneed - H2), (0, 0), (0, 0)))
    elif Hneed < H2:
        xp = xp[:, :Hneed]
    if Wneed < W2:
        xp = xp[:, :, :Wneed]

    osz = jnp.dtype(out_dtype).itemsize
    isz = jnp.dtype(cdt).itemsize

    use_gemm = (K == 1) or (K * K * Cin <= 2 * LANE)

    if use_gemm:
        # -------- small-Cin / 1x1 path: fold taps into the contraction --------
        CKK = K * K * Cin
        ho = jnp.arange(Ho_pad)
        wo = jnp.arange(Wo)
        kk = jnp.arange(K)
        rows = ho[:, None] * stride + kk[None, :] * dilation            # (Ho_pad, K)
        cols = wo[:, None] * stride + kk[None, :] * dilation            # (Wo, K)
        xg = xp[:, rows]                    # (N, Ho_pad, K, Wneed, Cin)
        xg = xg[:, :, :, cols]              # (N, Ho_pad, K, Wo, K, Cin)
        x_col = jnp.transpose(xg, (0, 1, 3, 2, 4, 5)).reshape(N, Ho_pad, Wo, CKK)
        x_col = x_col.astype(cdt)

        w_mat = w_hwio.reshape(CKK, Cout)
        w_mat = jnp.pad(w_mat, ((0, 0), (0, Cout_p - Cout))).astype(cdt)

        kernel = partial(_gemm_kernel, tile_ho=tile_ho, Wo=Wo)
        est = (2 * tile_ho * Wo * CKK * isz          # input band (double-buffered)
               + CKK * Cout_p * isz + Cout_p * 4     # constants (single-buffered)
               + 2 * tile_ho * Wo * Cout_p * osz)    # output band

        def call(const_mode):
            return pl.pallas_call(
                kernel,
                out_shape=jax.ShapeDtypeStruct((N, Ho_pad, Wo, Cout_p), out_dtype),
                grid_spec=pltpu.PrefetchScalarGridSpec(
                    num_scalar_prefetch=0,
                    grid=(N, tiles_h),
                    in_specs=[
                        pl.BlockSpec((1, tile_ho, Wo, CKK),
                                     lambda n, t: (n, t, 0, 0)),
                        pl.BlockSpec((CKK, Cout_p), lambda n, t: (0, 0),
                                     pipeline_mode=const_mode),
                        pl.BlockSpec((1, Cout_p), lambda n, t: (0, 0),
                                     pipeline_mode=const_mode),
                    ],
                    out_specs=pl.BlockSpec((1, tile_ho, Wo, Cout_p),
                                           lambda n, t: (n, t, 0, 0)),
                ),
                compiler_params=pltpu.CompilerParams(
                    dimension_semantics=("parallel", "parallel"),
                    vmem_limit_bytes=_vmem_limit_bytes(est)),
            )(x_col, w_mat, bias_p)

    else:
        # -------- large-Cin path: halo-banded direct conv --------
        Cin_p = _round_up(Cin, LANE)
        xpp = jnp.pad(xp, ((0, 0), (0, 0), (0, 0), (0, Cin_p - Cin)))
        band_h = (tile_ho - 1) * stride + Keff
        starts = jnp.arange(tiles_h) * (tile_ho * stride)
        band_rows = starts[:, None] + jnp.arange(band_h)[None, :]       # (tiles_h, band_h)
        x_bands = xpp[:, band_rows]         # (N, tiles_h, band_h, Wneed, Cin_p)
        x_bands = x_bands.reshape(N * tiles_h, band_h, Wneed, Cin_p).astype(cdt)

        w_p = jnp.pad(w_hwio, ((0, 0), (0, 0), (0, Cin_p - Cin),
                               (0, Cout_p - Cout))).astype(cdt)

        kernel = partial(_direct_kernel, K=K, stride=stride, dilation=dilation,
                         tile_ho=tile_ho, Wo=Wo)
        est = (2 * band_h * Wneed * Cin_p * isz
               + K * K * Cin_p * Cout_p * isz + Cout_p * 4
               + 2 * tile_ho * Wo * Cout_p * osz)

        def call(const_mode):
            return pl.pallas_call(
                kernel,
                out_shape=jax.ShapeDtypeStruct((N, Ho_pad, Wo, Cout_p), out_dtype),
                grid_spec=pltpu.PrefetchScalarGridSpec(
                    num_scalar_prefetch=0,
                    grid=(N, tiles_h),
                    in_specs=[
                        pl.BlockSpec((1, band_h, Wneed, Cin_p),
                                     lambda n, t: (n * tiles_h + t, 0, 0, 0)),
                        pl.BlockSpec((K, K, Cin_p, Cout_p),
                                     lambda n, t: (0, 0, 0, 0),
                                     pipeline_mode=const_mode),
                        pl.BlockSpec((1, Cout_p), lambda n, t: (0, 0),
                                     pipeline_mode=const_mode),
                    ],
                    out_specs=pl.BlockSpec((1, tile_ho, Wo, Cout_p),
                                           lambda n, t: (n, t, 0, 0)),
                ),
                compiler_params=pltpu.CompilerParams(
                    dimension_semantics=("parallel", "parallel"),
                    vmem_limit_bytes=_vmem_limit_bytes(est)),
            )(x_bands, w_p, bias_p)

    try:
        out_nhwc = call(pl.Buffered(1))     # weights/bias are grid-constant
    except Exception:
        out_nhwc = call(None)               # fall back to default buffering

    # Drop channel / row padding, NHWC -> NCHW.
    out = out_nhwc[:, :Ho, :, :Cout]
    return jnp.transpose(out, (0, 3, 1, 2))


# ----------------------------------------------------------------------------
# Reference + self-check
# ----------------------------------------------------------------------------
def _reference(x_nchw, weight_oihw, gamma, beta, running_mean, running_var, *,
               stride, pad, dilation, eps=1e-5):
    y = jax.lax.conv_general_dilated(
        x_nchw, weight_oihw,
        window_strides=(stride, stride),
        padding=[(pad, pad), (pad, pad)],
        rhs_dilation=(dilation, dilation),
        dimension_numbers=("NCHW", "OIHW", "NCHW"),
    )
    inv_std = 1.0 / jnp.sqrt(running_var + eps)
    scale = (gamma * inv_std).reshape(1, -1, 1, 1)
    bias = (beta - running_mean * gamma * inv_std).reshape(1, -1, 1, 1)
    return y * scale + bias


if __name__ == "__main__":
    key = jax.random.PRNGKey(0)

    def make_case(ck, N, Cin, H, W, Cout, K):
        kx, kw, kg, kb, km, kv = jax.random.split(ck, 6)
        x = jax.random.normal(kx, (N, Cin, H, W), dtype=jnp.float32)
        fan_out = K * K * Cout        # conv init: normal(0, sqrt(2/fan_out))
        w = jax.random.normal(kw, (Cout, Cin, K, K), dtype=jnp.float32) \
            * jnp.sqrt(2.0 / fan_out)
        # Randomized BN stats (stronger check than the identity init).
        gamma = 1.0 + 0.1 * jax.random.normal(kg, (Cout,), jnp.float32)
        beta = 0.1 * jax.random.normal(kb, (Cout,), jnp.float32)
        mean = 0.1 * jax.random.normal(km, (Cout,), jnp.float32)
        var = jax.random.uniform(kv, (Cout,), jnp.float32, minval=0.5, maxval=1.5)
        return x, w, gamma, beta, mean, var

    cases = [
        # (name,            N, Cin, H,  W,  Cout, K, stride, pad, dilation)
        ("gemm_small_cin",  2, 4,   16, 16, 8,    3, 1,      1,   1),   # spec default
        ("gemm_stride2",    1, 3,   17, 17, 16,   3, 2,      1,   1),   # stem-like
        ("direct_wide_cin", 2, 128, 16, 16, 128,  3, 1,      1,   1),   # large-Cin path
    ]
    keys = jax.random.split(key, len(cases))
    for (name, N, Cin, H, W, Cout, K, s, p, d), ck in zip(cases, keys):
        x, w, gamma, beta, mean, var = make_case(ck, N, Cin, H, W, Cout, K)
        out = conv2d_bn(x, w, gamma, beta, mean, var,
                        stride=s, pad=p, dilation=d)
        out = jax.block_until_ready(out)
        ref = _reference(x, w, gamma, beta, mean, var,
                         stride=s, pad=p, dilation=d)
        assert out.shape == ref.shape, (name, out.shape, ref.shape)
        assert jnp.allclose(out, ref, atol=1e-3, rtol=1e-3), f"mismatch: {name}"

    print("KERNEL_OK")
</pallas_src>

<mosaic_0001>
module attributes {stable_mosaic.version = 11 : i64} {
  func.func @_gemm_kernel(%arg0: i32, %arg1: i32, %arg2: memref<1x16x16x36xf32, #tpu.memory_space<vmem>>, %arg3: memref<36x128xf32, #tpu.memory_space<vmem>>, %arg4: memref<1x128xf32, #tpu.memory_space<vmem>>, %arg5: memref<1x16x16x128xf32, #tpu.memory_space<vmem>>) attributes {dimension_semantics = [#tpu.dimension_semantics<parallel>, #tpu.dimension_semantics<parallel>], iteration_bounds = array<i64: 2, 1>, scalar_prefetch = 0 : i64, scratch_operands = 0 : i64, tpu.core_type = #tpu.core_type<tc>, window_params = [{transform_indices = @transform_0, window_bounds = array<i64: 1, 16, 16, 36>}, {pipeline_mode = #tpu.pipeline_mode<synchronous>, transform_indices = @transform_1, window_bounds = array<i64: 36, 128>}, {pipeline_mode = #tpu.pipeline_mode<synchronous>, transform_indices = @transform_2, window_bounds = array<i64: 1, 128>}, {transform_indices = @transform_3, window_bounds = array<i64: 1, 16, 16, 128>}]} {
    %c0 = arith.constant 0 : index
    %c0_0 = arith.constant 0 : index
    %c0_1 = arith.constant 0 : index
    %c0_2 = arith.constant 0 : index
    %0 = vector.load %arg2[%c0, %c0_0, %c0_1, %c0_2] : memref<1x16x16x36xf32, #tpu.memory_space<vmem>>, vector<1x16x16x36xf32>
    %1 = vector.shape_cast %0 : vector<1x16x16x36xf32> to vector<16x16x36xf32>
    %2 = vector.shape_cast %1 : vector<16x16x36xf32> to vector<256x36xf32>
    %c0_3 = arith.constant 0 : index
    %c0_4 = arith.constant 0 : index
    %3 = vector.load %arg3[%c0_3, %c0_4] : memref<36x128xf32, #tpu.memory_space<vmem>>, vector<36x128xf32>
    %cst = arith.constant dense<0.000000e+00> : vector<256x128xf32>
    %4 = tpu.matmul %2, %3, %cst {dimension_numbers = #tpu.dot_dimension_numbers<[1], [0], [0], [1], [0, 0, 1, 1], [], []>} : vector<256x36xf32>, vector<36x128xf32>, vector<256x128xf32> -> vector<256x128xf32>
    %c0_5 = arith.constant 0 : index
    %c0_6 = arith.constant 0 : index
    %5 = vector.load %arg4[%c0_5, %c0_6] : memref<1x128xf32, #tpu.memory_space<vmem>>, vector<1x128xf32>
    %6 = vector.broadcast %5 : vector<1x128xf32> to vector<256x128xf32>
    %7 = arith.addf %4, %6 : vector<256x128xf32>
    %8 = vector.shape_cast %7 : vector<256x128xf32> to vector<16x16x128xf32>
    %c0_7 = arith.constant 0 : index
    %c0_8 = arith.constant 0 : index
    %c0_9 = arith.constant 0 : index
    %c0_10 = arith.constant 0 : index
    %9 = vector.load %arg5[%c0_7, %c0_8, %c0_9, %c0_10] : memref<1x16x16x128xf32, #tpu.memory_space<vmem>>, vector<1x16x16x128xf32>
    %10 = vector.shape_cast %9 : vector<1x16x16x128xf32> to vector<16x16x128xf32>
    %11 = vector.shape_cast %8 : vector<16x16x128xf32> to vector<1x16x16x128xf32>
    tpu.vector_store %arg5[%c0_7, %c0_8, %c0_9, %c0_10], %11 {strides = array<i32>} : memref<1x16x16x128xf32, #tpu.memory_space<vmem>>, vector<1x16x16x128xf32>,
    return
  }
  func.func @transform_0(%arg0: i32, %arg1: i32) -> (i32, i32, i32, i32) {
    %c0_i32 = arith.constant 0 : i32
    %c0_i32_0 = arith.constant 0 : i32
    %c0_i32_1 = arith.constant 0 : i32
    return %arg0, %arg1, %c0_i32, %c0_i32_0 : i32, i32, i32, i32
  }
  func.func @transform_1(%arg0: i32, %arg1: i32) -> (i32, i32) {
    %c0_i32 = arith.constant 0 : i32
    %c0_i32_0 = arith.constant 0 : i32
    %c0_i32_1 = arith.constant 0 : i32
    return %c0_i32, %c0_i32_0 : i32, i32
  }
  func.func @transform_2(%arg0: i32, %arg1: i32) -> (i32, i32) {
    %c0_i32 = arith.constant 0 : i32
    %c0_i32_0 = arith.constant 0 : i32
    %c0_i32_1 = arith.constant 0 : i32
    return %c0_i32, %c0_i32_0 : i32, i32
  }
  func.func @transform_3(%arg0: i32, %arg1: i32) -> (i32, i32, i32, i32) {
    %c0_i32 = arith.constant 0 : i32
    %c0_i32_0 = arith.constant 0 : i32
    %c0_i32_1 = arith.constant 0 : i32
    return %arg0, %arg1, %c0_i32, %c0_i32_0 : i32, i32, i32, i32
  }
}

module attributes {stable_mosaic.version = 11 : i64} {
  func.func @_gemm_kernel(%arg0: i32, %arg1: i32, %arg2: memref<1x16x16x36xf32, #tpu.memory_space<vmem>>, %arg3: memref<36x128xf32, #tpu.memory_space<vmem>>, %arg4: memref<1x128xf32, #tpu.memory_space<vmem>>, %arg5: memref<1x16x16x128xf32, #tpu.memory_space<vmem>>) attributes {dimension_semantics = [#tpu.dimension_semantics<parallel>, #tpu.dimension_semantics<parallel>], iteration_bounds = array<i64: 2, 1>, scalar_prefetch = 0 : i64, scratch_operands = 0 : i64, tpu.core_type = #tpu.core_type<tc>, window_params = [{transform_indices = @transform_0, window_bounds = array<i64: 1, 16, 16, 36>}, {pipeline_mode = #tpu.pipeline_mode<synchronous>, transform_indices = @transform_1, window_bounds = array<i64: 36, 128>}, {pipeline_mode = #tpu.pipeline_mode<synchronous>, transform_indices = @transform_2, window_bounds = array<i64: 1, 128>}, {transform_indices = @transform_3, window_bounds = array<i64: 1, 16, 16, 128>}]} {
    %c0 = arith.constant 0 : index
    %c0_0 = arith.constant 0 : index
    %c0_1 = arith.constant 0 : index
    %c0_2 = arith.constant 0 : index
    %0 = vector.load %arg2[%c0, %c0_0, %c0_1, %c0_2] : memref<1x16x16x36xf32, #tpu.memory_space<vmem>>, vector<1x16x16x36xf32>
    %1 = vector.shape_cast %0 : vector<1x16x16x36xf32> to vector<16x16x36xf32>
    %2 = vector.shape_cast %1 : vector<16x16x36xf32> to vector<256x36xf32>
    %c0_3 = arith.constant 0 : index
    %c0_4 = arith.constant 0 : index
    %3 = vector.load %arg3[%c0_3, %c0_4] : memref<36x128xf32, #tpu.memory_space<vmem>>, vector<36x128xf32>
    %cst = arith.constant dense<0.000000e+00> : vector<256x128xf32>
    %4 = tpu.matmul %2, %3, %cst {dimension_numbers = #tpu.dot_dimension_numbers<[1], [0], [0], [1], [0, 0, 1, 1], [], []>} : vector<256x36xf32>, vector<36x128xf32>, vector<256x128xf32> -> vector<256x128xf32>
    %c0_5 = arith.constant 0 : index
    %c0_6 = arith.constant 0 : index
    %5 = vector.load %arg4[%c0_5, %c0_6] : memref<1x128xf32, #tpu.memory_space<vmem>>, vector<1x128xf32>
    %6 = vector.broadcast %5 : vector<1x128xf32> to vector<256x128xf32>
    %7 = arith.addf %4, %6 : vector<256x128xf32>
    %8 = vector.shape_cast %7 : vector<256x128xf32> to vector<16x16x128xf32>
    %c0_7 = arith.constant 0 : index
    %c0_8 = arith.constant 0 : index
    %c0_9 = arith.constant 0 : index
    %c0_10 = arith.constant 0 : index
    %9 = vector.load %arg5[%c0_7, %c0_8, %c0_9, %c0_10] : memref<1x16x16x128xf32, #tpu.memory_space<vmem>>, vector<1x16x16x128xf32>
    %10 = vector.shape_cast %9 : vector<1x16x16x128xf32> to vector<16x16x128xf32>
    %11 = vector.shape_cast %8 : vector<16x16x128xf32> to vector<1x16x16x128xf32>
    tpu.vector_store %arg5[%c0_7, %c0_8, %c0_9, %c0_10], %11 {strides = array<i32>} : memref<1x16x16x128xf32, #tpu.memory_space<vmem>>, vector<1x16x16x128xf32>,
    return
  }
  func.func @transform_0(%arg0: i32, %arg1: i32) -> (i32, i32, i32, i32) {
    %c0_i32 = arith.constant 0 : i32
    %c0_i32_0 = arith.constant 0 : i32
    %c0_i32_1 = arith.constant 0 : i32
    return %arg0, %arg1, %c0_i32, %c0_i32_0 : i32, i32, i32, i32
  }
  func.func @transform_1(%arg0: i32, %arg1: i32) -> (i32, i32) {
    %c0_i32 = arith.constant 0 : i32
    %c0_i32_0 = arith.constant 0 : i32
    %c0_i32_1 = arith.constant 0 : i32
    return %c0_i32, %c0_i32_0 : i32, i32
  }
  func.func @transform_2(%arg0: i32, %arg1: i32) -> (i32, i32) {
    %c0_i32 = arith.constant 0 : i32
    %c0_i32_0 = arith.constant 0 : i32
    %c0_i32_1 = arith.constant 0 : i32
    return %c0_i32, %c0_i32_0 : i32, i32
  }
  func.func @transform_3(%arg0: i32, %arg1: i32) -> (i32, i32, i32, i32) {
    %c0_i32 = arith.constant 0 : i32
    %c0_i32_0 = arith.constant 0 : i32
    %c0_i32_1 = arith.constant 0 : i32
    return %arg0, %arg1, %c0_i32, %c0_i32_0 : i32, i32, i32, i32
  }
}

</mosaic_0001>

<llo_original>
// kernel: tpu_custom_call.1
$region0: #{tpu_custom_call.1}
  #allocation0 [shape = 'u32[]', space=smem, size = 0x4, offset = 0x4, fixed_abs, tag = 'smem constant byte address 0x4 - core index']
  #allocation1 [shape = 'u32[72,128]{1,0:T(1,128)}', space=vmem, size = 0x9000, scoped, tag = 'internal scratch']
  %s0 = inlined_call_operand.hbm [shape: f32[2,16,16,36], index: 0, kind: input, shape index: {}]
  %s1 = inlined_call_operand.hbm [shape: f32[36,128], index: 1, kind: input, shape index: {}]
  %s2 = inlined_call_operand.vmem [shape: f32[1,128], index: 2, kind: input, shape index: {}]
  %s3 = inlined_call_operand.hbm [shape: f32[2,16,16,128], index: 3, kind: output, shape index: {}]
  %s4 = sld [smem:[#allocation0]]
  $region53: #{tpu_custom_call.1} parent=0
    _
  %s6 = ssub.s32 1, %s4
  %s7 = scalar_select 0, %s6, %s4
  $region1: #{tpu_custom_call.1} parent=0
    #allocation2 [shape = 'u8[262144]{0}', space=vmem, size = 0x40000, scoped, tag = 'input window, operand 0']
    #allocation3 [shape = 's32[2]{0}', space=sflag, size = 0x8, scoped, tag = 'scoped memory for tpu_custom_call.1']
    #allocation4 [shape = 's32[2]{0}', space=sflag, size = 0x8, scoped, tag = 'scoped memory for tpu_custom_call.1']
    #allocation5 [shape = 'u8[20480]{0}', space=vmem, size = 0x5000, scoped, tag = 'input window, operand 1, single buffered']
    #allocation6 [shape = 's32[1]{0}', space=sflag, size = 0x4, scoped, tag = 'scoped memory for tpu_custom_call.1']
    #allocation7 [shape = 'u8[262144]{0}', space=vmem, size = 0x40000, scoped, tag = 'output window, operand 0']
    %8 = vsyncpa [#allocation3], 0
    %s9 = scalar_lea.sflag [#allocation3], 1
    %10 = vsyncpa %s9, 0
    %11 = vsyncpa [#allocation6], 0
    %12 = vsyncpa [#allocation4], 0
    %s13 = scalar_lea.sflag [#allocation4], 1
    %14 = vsyncpa %s13, 0
    loop: start=0, step=1, limit=4
    $region2: #{tpu_custom_call.1} parent=1 // loop_pre_header
      _
    $region3: #{tpu_custom_call.1} parent=1 // loop_header
      %s16 = sphi 0, %s20
      %p17 = scmp.ge.s32.totalorder %s16, 4
      %s23 = sphi 0, %s35
      %s24 = sphi 0, %s31
      %s25 = sphi 0, %s23
      %s26 = sphi 0, %s24
      %s27 = sphi 0, %s25
      %s28 = sphi 0, %s26
      %s40 = sphi 0, %s42
      %s43 = sphi 0, %s40
      %s44 = sphi 0, %s43
      %s60 = sphi 0, %s44
      %s64 = sphi 0, %s64
      %s66 = sphi 0, %s64
      %s67 = sphi 0, %s66
      %s81 = sphi 0, %s67
      %s85 = sphi 0, %s85
      %s87 = sphi 0, %s85
      %s88 = sphi 0, %s87
      %s102 = sphi 0, %s88
      %s110 = sphi 0, %s112
      %s113 = sphi 0, %s110
      %s114 = sphi 0, %s113
      %s130 = sphi 0, %s114
    $region4: #{tpu_custom_call.1} parent=1 // loop_header_branch
      %19 = sbr.rel (%p17) target = $region8
    $region5: #{tpu_custom_call.1} parent=1 // loop_body
      %s21 = ssub.s32 %s16, 1
      %s22 = ssub.s32 %s16, 2
      %s29 = sadd.s32 1, %s24
      %p30 = scmp.ge.s32.totalorder %s29, 1
      %s31 = scalar_select %p30, 0, %s29
      %s32 = sadd.s32 1, %s23
      %s33 = scalar_select %p30, %s32, %s23
      %p34 = scmp.ge.s32.totalorder %s33, 2
      %s35 = scalar_select %p34, 0, %s33
      %s36 = ssub.s32 %s23, %s35
      %s37 = ssub.s32 %s24, %s31
      %s38 = sor.u32 %s36, %s37
      %p39 = scmp.eq.s32.totalorder %s38, 0
      %s41 = sadd.s32 %s40, 1
      %s42 = scalar_select %p39, %s40, %s41
      %p45 = pneg %p39
      %p46 = scmp.eq.s32.totalorder %s16, 1
      %p47 = por %p45, %p46
      %p48 = scmp.ne.s32.totalorder %s40, %s43
      %p49 = scmp.eq.s32.totalorder %s16, 0
      %p50 = por %p48, %p49
      %p51 = scmp.ne.s32.totalorder %s40, %s43
      %p52 = scmp.eq.s32.totalorder %s21, 1
      %p53 = por %p51, %p52
      %p54 = scmp.ne.s32.totalorder %s43, %s44
      %p55 = scmp.eq.s32.totalorder %s21, 0
      %p56 = por %p54, %p55
      %p57 = scmp.ne.s32.totalorder %s43, %s44
      %p58 = scmp.eq.s32.totalorder %s22, 1
      %p59 = por %p57, %p58
      %p61 = scmp.ne.s32.totalorder %s44, %s60
      %p62 = scmp.eq.s32.totalorder %s22, 0
      %p63 = por %p61, %p62
      %s65 = sadd.s32 %s64, 1
      %p68 = scmp.eq.s32.totalorder %s16, 1
      %p69 = scmp.ne.s32.totalorder %s64, %s66
      %p70 = scmp.eq.s32.totalorder %s16, 0
      %p71 = por %p69, %p70
      %p72 = scmp.ne.s32.totalorder %s64, %s66
      %p73 = scmp.eq.s32.totalorder %s21, 1
      %p74 = por %p72, %p73
      %p75 = scmp.ne.s32.totalorder %s66, %s67
      %p76 = scmp.eq.s32.totalorder %s21, 0
      %p77 = por %p75, %p76
      %p78 = scmp.ne.s32.totalorder %s66, %s67
      %p79 = scmp.eq.s32.totalorder %s22, 1
      %p80 = por %p78, %p79
      %p82 = scmp.ne.s32.totalorder %s67, %s81
      %p83 = scmp.eq.s32.totalorder %s22, 0
      %p84 = por %p82, %p83
      %s86 = sadd.s32 %s85, 1
      %p89 = scmp.eq.s32.totalorder %s16, 1
      %p90 = scmp.ne.s32.totalorder %s85, %s87
      %p91 = scmp.eq.s32.totalorder %s16, 0
      %p92 = por %p90, %p91
      %p93 = scmp.ne.s32.totalorder %s85, %s87
      %p94 = scmp.eq.s32.totalorder %s21, 1
      %p95 = por %p93, %p94
      %p96 = scmp.ne.s32.totalorder %s87, %s88
      %p97 = scmp.eq.s32.totalorder %s21, 0
      %p98 = por %p96, %p97
      %p99 = scmp.ne.s32.totalorder %s87, %s88
      %p100 = scmp.eq.s32.totalorder %s22, 1
      %p101 = por %p99, %p100
      %p103 = scmp.ne.s32.totalorder %s88, %s102
      %p104 = scmp.eq.s32.totalorder %s22, 0
      %p105 = por %p103, %p104
      %s106 = ssub.s32 %s23, %s35
      %s107 = ssub.s32 %s24, %s31
      %s108 = sor.u32 %s106, %s107
      %p109 = scmp.eq.s32.totalorder %s108, 0
      %s111 = sadd.s32 %s110, 1
      %s112 = scalar_select %p109, %s110, %s111
      %p115 = pneg %p109
      %p116 = scmp.eq.s32.totalorder %s16, 1
      %p117 = por %p115, %p116
      %p118 = scmp.ne.s32.totalorder %s110, %s113
      %p119 = scmp.eq.s32.totalorder %s16, 0
      %p120 = por %p118, %p119
      %p121 = scmp.ne.s32.totalorder %s110, %s113
      %p122 = scmp.eq.s32.totalorder %s21, 1
      %p123 = por %p121, %p122
      %p124 = scmp.ne.s32.totalorder %s113, %s114
      %p125 = scmp.eq.s32.totalorder %s21, 0
      %p126 = por %p124, %p125
      %p127 = scmp.ne.s32.totalorder %s113, %s114
      %p128 = scmp.eq.s32.totalorder %s22, 1
      %p129 = por %p127, %p128
      %p131 = scmp.ne.s32.totalorder %s114, %s130
      %p132 = scmp.eq.s32.totalorder %s22, 0
      %p133 = por %p131, %p132
      %p134 = scmp.le.s32.totalorder 1, %s16
      %p135 = scmp.lt.s32.totalorder %s16, 3
      %p136 = pnand %p134, %p135
      %p137 = pneg %p136
      // Predicated region
      $region9: #{tpu_custom_call.1} parent=5 // pred_check
        _
      $region10: #{tpu_custom_call.1} parent=5 // pred_check_branch
        %139 = sbr.rel (%p136) target = $region12
      $region11: #{tpu_custom_call.1} parent=5 // pred_region
        %s140 = ssub.s32 %s16, 1
        // Predicated region
        $region13: #{tpu_custom_call.1} parent=11 // pred_check
          %p141 = pneg %p77
        $region14: #{tpu_custom_call.1} parent=11 // pred_check_branch
          %143 = sbr.rel (%p141) target = $region16
        $region15: #{tpu_custom_call.1} parent=11 // pred_region
          %145 = vsyncadd [#allocation6], 0
          %s146 = sshll.u32 %s1, 4
          %s147 = int_to_ptr.hbm [resolvable:$true] %s146
          %s148 = sshll.u32 [#allocation5], 4
          %s149 = int_to_ptr.vmem [resolvable:$true] %s148
          %154 = dma.hbm_to_vmem [thread:$0]  %s147, 640, %s149, [#allocation6], 128, 128, 8
        $region16: #{tpu_custom_call.1} parent=11 // pred_fallthru
          _
        // Predicated region
        $region17: #{tpu_custom_call.1} parent=11 // pred_check
          %p155 = pneg %p98
        $region18: #{tpu_custom_call.1} parent=11 // pred_check_branch
          %157 = sbr.rel (%p155) target = $region20
        $region19: #{tpu_custom_call.1} parent=11 // pred_region
          _
        $region20: #{tpu_custom_call.1} parent=11 // pred_fallthru
          _
      $region12: #{tpu_custom_call.1} parent=5 // pred_fallthru
        _
      %p158 = scmp.lt.s32.totalorder %s16, 2
      // Predicated region
      $region21: #{tpu_custom_call.1} parent=5 // pred_check
        %p159 = pneg %p158
      $region22: #{tpu_custom_call.1} parent=5 // pred_check_branch
        %161 = sbr.rel (%p159) target = $region24
      $region23: #{tpu_custom_call.1} parent=5 // pred_region
        // Predicated region
        $region25: #{tpu_custom_call.1} parent=23 // pred_check
          %p162 = pneg %p50
        $region26: #{tpu_custom_call.1} parent=23 // pred_check_branch
          %164 = sbr.rel (%p162) target = $region28
        $region27: #{tpu_custom_call.1} parent=23 // pred_region
          %s165 = sand.u32 %s40, 1
          %s166 = scalar_lea.sflag [#allocation3], %s165
          %s167 = sand.u32 %s40, 1
          %s168 = smul.addr %s167, 256
          %s169 = scalar_lea.vmem [#allocation2], %s168
          %s170 = smul.u32 16, %s24
          %172 = vsyncadd %s166, 0
          %s173 = smul.addr %s170, 2
          %s174 = smul.addr %s23, 32
          %s175 = sadd.s32 %s173, %s174
          %s176 = smul.addr %s175, 8
          %s177 = scalar_lea.hbm %s0, %s176
          %s178 = sshll.u32 %s177, 4
          %s179 = int_to_ptr.hbm [resolvable:$true] %s178
          %s180 = sshll.u32 %s169, 4
          %s181 = int_to_ptr.vmem [resolvable:$true] %s180
          %186 = dma.hbm_to_vmem [thread:$0]  %s179, 4096, %s181, %s166, 128, 128, 8
        $region28: #{tpu_custom_call.1} parent=23 // pred_fallthru
          _
      $region24: #{tpu_custom_call.1} parent=5 // pred_fallthru
        _
      %p187 = scmp.le.s32.totalorder 1, %s16
      %p188 = scmp.lt.s32.totalorder %s16, 3
      %p189 = pnand %p187, %p188
      %p190 = pneg %p189
      // Predicated region
      $region29: #{tpu_custom_call.1} parent=5 // pred_check
        _
      $region30: #{tpu_custom_call.1} parent=5 // pred_check_branch
        %192 = sbr.rel (%p189) target = $region32
      $region31: #{tpu_custom_call.1} parent=5 // pred_region
        %s193 = ssub.s32 %s16, 1
        %s194 = sand.u32 %s43, 1
        %s195 = scalar_lea.sflag [#allocation3], %s194
        %s196 = sand.u32 %s43, 1
        %s197 = smul.addr %s196, 256
        %s198 = scalar_lea.vmem [#allocation2], %s197
        // Predicated region
        $region33: #{tpu_custom_call.1} parent=31 // pred_check
          %p199 = pneg %p56
        $region34: #{tpu_custom_call.1} parent=31 // pred_check_branch
          %201 = sbr.rel (%p199) target = $region36
        $region35: #{tpu_custom_call.1} parent=31 // pred_region
          %203 = dma.done %s195, 4096
        $region36: #{tpu_custom_call.1} parent=31 // pred_fallthru
          _
        // Predicated region
        $region37: #{tpu_custom_call.1} parent=31 // pred_check
          %p204 = pneg %p77
        $region38: #{tpu_custom_call.1} parent=31 // pred_check_branch
          %206 = sbr.rel (%p204) target = $region40
        $region39: #{tpu_custom_call.1} parent=31 // pred_region
          %208 = dma.done [#allocation6], 640
        $region40: #{tpu_custom_call.1} parent=31 // pred_fallthru
          _
        %s209 = sand.u32 %s43, 1
        %s210 = scalar_lea.sflag [#allocation3], %s209
        %s211 = sand.u32 %s43, 1
        %s212 = smul.addr %s211, 256
        %s213 = scalar_lea.vmem [#allocation2], %s212
        %p214 = pneg %p56
        %p215 = pneg %p53
        %p216 = pneg %p77
        %p217 = pneg %p74
        %p218 = pneg %p98
        %p219 = pneg %p95
        %p220 = pneg %p126
        %p221 = pneg %p123
        %s222 = sand.u32 %s113, 1
        %s223 = scalar_lea.sflag [#allocation4], %s222
        %s224 = sand.u32 %s113, 1
        %s225 = smul.addr %s224, 256
        %s226 = scalar_lea.vmem [#allocation7], %s225
        %s227 = smul.u32 16, %s26
        %s228 = smul.u32 16, %s26
        %v229 = vld [vmem:[%s198] sm:$0xff]
        %v230 = vld [vmem:[%s198 + $0x8] sm:$0xff]
        %v231 = vld [vmem:[%s198 + $0x10] sm:$0xff]
        %v232 = vld [vmem:[%s198 + $0x18] sm:$0xff]
        %v233 = vld [vmem:[%s198 + $0x20] sm:$0xff]
        %v234 = vld [vmem:[%s198 + $0x28] sm:$0xff]
        %v235 = vld [vmem:[%s198 + $0x30] sm:$0xff]
        %v236 = vld [vmem:[%s198 + $0x38] sm:$0xff]
        %v237 = vld [vmem:[%s198 + $0x40] sm:$0xff]
        %v238 = vld [vmem:[%s198 + $0x48] sm:$0xff]
        %v239 = vld [vmem:[%s198 + $0x50] sm:$0xff]
        %v240 = vld [vmem:[%s198 + $0x58] sm:$0xff]
        %v241 = vld [vmem:[%s198 + $0x60] sm:$0xff]
        %v242 = vld [vmem:[%s198 + $0x68] sm:$0xff]
        %v243 = vld [vmem:[%s198 + $0x70] sm:$0xff]
        %v244 = vld [vmem:[%s198 + $0x78] sm:$0xff]
        %v245 = vld [vmem:[%s198 + $0x80] sm:$0xff]
        %v246 = vld [vmem:[%s198 + $0x88] sm:$0xff]
        %v247 = vld [vmem:[%s198 + $0x90] sm:$0xff]
        %v248 = vld [vmem:[%s198 + $0x98] sm:$0xff]
        %v249 = vld [vmem:[%s198 + $0xa0] sm:$0xff]
        %v250 = vld [vmem:[%s198 + $0xa8] sm:$0xff]
        %v251 = vld [vmem:[%s198 + $0xb0] sm:$0xff]
        %v252 = vld [vmem:[%s198 + $0xb8] sm:$0xff]
        %v253 = vld [vmem:[%s198 + $0xc0] sm:$0xff]
        %v254 = vld [vmem:[%s198 + $0xc8] sm:$0xff]
        %v255 = vld [vmem:[%s198 + $0xd0] sm:$0xff]
        %v256 = vld [vmem:[%s198 + $0xd8] sm:$0xff]
        %v257 = vld [vmem:[%s198 + $0xe0] sm:$0xff]
        %v258 = vld [vmem:[%s198 + $0xe8] sm:$0xff]
        %v259 = vld [vmem:[%s198 + $0xf0] sm:$0xff]
        %v260 = vld [vmem:[%s198 + $0xf8] sm:$0xff]
        %v261 = vld [vmem:[#allocation5] sm:$0xff]
        %v262 = vld [vmem:[#allocation5 + $0x8] sm:$0xff]
        %v263 = vld [vmem:[#allocation5 + $0x10] sm:$0xff]
        %v264 = vld [vmem:[#allocation5 + $0x18] sm:$0xff]
        %v265 = vld [vmem:[#allocation5 + $0x20] sm:$0xf]
        %v266 = vld [vmem:[%s2] sm:$0x1]
        %v268 = vperm.slane %v266, 0
        %vm270 = vcmask 293888
        %v272 = vsel %vm270, %v229, 0
        %v275 = vsel %vm270, %v230, 0
        %v278 = vsel %vm270, %v231, 0
        %v281 = vsel %vm270, %v232, 0
        %v284 = vsel %vm270, %v233, 0
        %v287 = vsel %vm270, %v234, 0
        %v290 = vsel %vm270, %v235, 0
        %v293 = vsel %vm270, %v236, 0
        %v296 = vsel %vm270, %v237, 0
        %v299 = vsel %vm270, %v238, 0
        %v302 = vsel %vm270, %v239, 0
        %v305 = vsel %vm270, %v240, 0
        %v308 = vsel %vm270, %v241, 0
        %v311 = vsel %vm270, %v242, 0
        %v314 = vsel %vm270, %v243, 0
        %v317 = vsel %vm270, %v244, 0
        %v320 = vsel %vm270, %v245, 0
        %v323 = vsel %vm270, %v246, 0
        %v326 = vsel %vm270, %v247, 0
        %v329 = vsel %vm270, %v248, 0
        %v332 = vsel %vm270, %v249, 0
        %v335 = vsel %vm270, %v250, 0
        %v338 = vsel %vm270, %v251, 0
        %v341 = vsel %vm270, %v252, 0
        %v344 = vsel %vm270, %v253, 0
        %v347 = vsel %vm270, %v254, 0
        %v350 = vsel %vm270, %v255, 0
        %v353 = vsel %vm270, %v256, 0
        %v356 = vsel %vm270, %v257, 0
        %v359 = vsel %vm270, %v258, 0
        %v362 = vsel %vm270, %v259, 0
        %v365 = vsel %vm270, %v260, 0
        %vm367 = vcmask 1043456
        %v369 = vsel %vm367, %v265, 0
        %371 = vmatpush.msra.mxu0 0.0
        %372 = vmatpush.msra.mxu0 0.0
        %373 = vmatpush.msra.mxu0 0.0
        %374 = vmatpush.msra.mxu0 0.0
        %375 = vmatpush.msra.mxu0 0.0
        %376 = vmatpush.msra.mxu0 0.0
        %377 = vmatpush.msra.mxu0 0.0
        %378 = vmatpush.msra.mxu0 0.0
        %379 = vmatpush.msra.mxu0 0.0
        %380 = vmatpush.msra.mxu0 0.0
        %381 = vmatpush.msra.mxu0 0.0
        %382 = vmatpush.msra.mxu0 %v369
        %383 = vmatpush.msra.mxu0 %v264
        %384 = vmatpush.msra.mxu0 %v263
        %385 = vmatpush.msra.mxu0 %v262
        %386 = vmatpush.msra.mxu0 %v261
        %387 = vmatmul.f32.gmra.mxu0 %v272
        %v388 = vpop.f32.mrf.mxu0
        %v389 = vadd.f32 %v268, %v388
        %390 = vmatmul.f32.gmra.mxu0 %v275
        %v391 = vpop.f32.mrf.mxu0
        %v392 = vadd.f32 %v268, %v391
        %393 = vmatmul.f32.gmra.mxu0 %v278
        %v394 = vpop.f32.mrf.mxu0
        %v395 = vadd.f32 %v268, %v394
        %396 = vmatmul.f32.gmra.mxu0 %v281
        %v397 = vpop.f32.mrf.mxu0
        %v398 = vadd.f32 %v268, %v397
        %399 = vmatmul.f32.gmra.mxu0 %v284
        %v400 = vpop.f32.mrf.mxu0
        %v401 = vadd.f32 %v268, %v400
        %402 = vmatmul.f32.gmra.mxu0 %v287
        %v403 = vpop.f32.mrf.mxu0
        %v404 = vadd.f32 %v268, %v403
        %405 = vmatmul.f32.gmra.mxu0 %v290
        %v406 = vpop.f32.mrf.mxu0
        %v407 = vadd.f32 %v268, %v406
        %408 = vmatmul.f32.gmra.mxu0 %v293
        %v409 = vpop.f32.mrf.mxu0
        %v410 = vadd.f32 %v268, %v409
        %411 = vmatmul.f32.gmra.mxu0 %v296
        %v412 = vpop.f32.mrf.mxu0
        %v413 = vadd.f32 %v268, %v412
        %414 = vmatmul.f32.gmra.mxu0 %v299
        %v415 = vpop.f32.mrf.mxu0
        %v416 = vadd.f32 %v268, %v415
        %417 = vmatmul.f32.gmra.mxu0 %v302
        %v418 = vpop.f32.mrf.mxu0
        %v419 = vadd.f32 %v268, %v418
        %420 = vmatmul.f32.gmra.mxu0 %v305
        %v421 = vpop.f32.mrf.mxu0
        %v422 = vadd.f32 %v268, %v421
        %423 = vmatmul.f32.gmra.mxu0 %v308
        %v424 = vpop.f32.mrf.mxu0
        %v425 = vadd.f32 %v268, %v424
        %426 = vmatmul.f32.gmra.mxu0 %v311
        %v427 = vpop.f32.mrf.mxu0
        %v428 = vadd.f32 %v268, %v427
        %429 = vmatmul.f32.gmra.mxu0 %v314
        %v430 = vpop.f32.mrf.mxu0
        %v431 = vadd.f32 %v268, %v430
        %432 = vmatmul.f32.gmra.mxu0 %v317
        %v433 = vpop.f32.mrf.mxu0
        %v434 = vadd.f32 %v268, %v433
        %435 = vmatmul.f32.gmra.mxu0 %v320
        %v436 = vpop.f32.mrf.mxu0
        %v437 = vadd.f32 %v268, %v436
        %438 = vmatmul.f32.gmra.mxu0 %v323
        %v439 = vpop.f32.mrf.mxu0
        %v440 = vadd.f32 %v268, %v439
        %441 = vmatmul.f32.gmra.mxu0 %v326
        %v442 = vpop.f32.mrf.mxu0
        %v443 = vadd.f32 %v268, %v442
        %444 = vmatmul.f32.gmra.mxu0 %v329
        %v445 = vpop.f32.mrf.mxu0
        %v446 = vadd.f32 %v268, %v445
        %447 = vmatmul.f32.gmra.mxu0 %v332
        %v448 = vpop.f32.mrf.mxu0
        %v449 = vadd.f32 %v268, %v448
        %450 = vmatmul.f32.gmra.mxu0 %v335
        %v451 = vpop.f32.mrf.mxu0
        %v452 = vadd.f32 %v268, %v451
        %453 = vmatmul.f32.gmra.mxu0 %v338
        %v454 = vpop.f32.mrf.mxu0
        %v455 = vadd.f32 %v268, %v454
        %456 = vmatmul.f32.gmra.mxu0 %v341
        %v457 = vpop.f32.mrf.mxu0
        %v458 = vadd.f32 %v268, %v457
        %459 = vmatmul.f32.gmra.mxu0 %v344
        %v460 = vpop.f32.mrf.mxu0
        %v461 = vadd.f32 %v268, %v460
        %462 = vmatmul.f32.gmra.mxu0 %v347
        %v463 = vpop.f32.mrf.mxu0
        %v464 = vadd.f32 %v268, %v463
        %465 = vmatmul.f32.gmra.mxu0 %v350
        %v466 = vpop.f32.mrf.mxu0
        %v467 = vadd.f32 %v268, %v466
        %468 = vmatmul.f32.gmra.mxu0 %v353
        %v469 = vpop.f32.mrf.mxu0
        %v470 = vadd.f32 %v268, %v469
        %471 = vmatmul.f32.gmra.mxu0 %v356
        %v472 = vpop.f32.mrf.mxu0
        %v473 = vadd.f32 %v268, %v472
        %474 = vmatmul.f32.gmra.mxu0 %v359
        %v475 = vpop.f32.mrf.mxu0
        %v476 = vadd.f32 %v268, %v475
        %477 = vmatmul.f32.gmra.mxu0 %v362
        %v478 = vpop.f32.mrf.mxu0
        %v479 = vadd.f32 %v268, %v478
        %480 = vmatmul.f32.gmra.mxu0 %v365
        %v481 = vpop.f32.mrf.mxu0
        %v482 = vadd.f32 %v268, %v481
        %483 = vdwg.mxu0
        %484 = vst [vmem:[%s226] sm:$0xff] %v389
        %485 = vst [vmem:[%s226 + $0x8] sm:$0xff] %v392
        %486 = vst [vmem:[%s226 + $0x10] sm:$0xff] %v395
        %487 = vst [vmem:[%s226 + $0x18] sm:$0xff] %v398
        %488 = vst [vmem:[%s226 + $0x20] sm:$0xff] %v401
        %489 = vst [vmem:[%s226 + $0x28] sm:$0xff] %v404
        %490 = vst [vmem:[%s226 + $0x30] sm:$0xff] %v407
        %491 = vst [vmem:[%s226 + $0x38] sm:$0xff] %v410
        %492 = vst [vmem:[%s226 + $0x40] sm:$0xff] %v413
        %493 = vst [vmem:[%s226 + $0x48] sm:$0xff] %v416
        %494 = vst [vmem:[%s226 + $0x50] sm:$0xff] %v419
        %495 = vst [vmem:[%s226 + $0x58] sm:$0xff] %v422
        %496 = vst [vmem:[%s226 + $0x60] sm:$0xff] %v425
        %497 = vst [vmem:[%s226 + $0x68] sm:$0xff] %v428
        %498 = vst [vmem:[%s226 + $0x70] sm:$0xff] %v431
        %499 = vst [vmem:[%s226 + $0x78] sm:$0xff] %v434
        %500 = vst [vmem:[%s226 + $0x80] sm:$0xff] %v437
        %501 = vst [vmem:[%s226 + $0x88] sm:$0xff] %v440
        %502 = vst [vmem:[%s226 + $0x90] sm:$0xff] %v443
        %503 = vst [vmem:[%s226 + $0x98] sm:$0xff] %v446
        %504 = vst [vmem:[%s226 + $0xa0] sm:$0xff] %v449
        %505 = vst [vmem:[%s226 + $0xa8] sm:$0xff] %v452
        %506 = vst [vmem:[%s226 + $0xb0] sm:$0xff] %v455
        %507 = vst [vmem:[%s226 + $0xb8] sm:$0xff] %v458
        %508 = vst [vmem:[%s226 + $0xc0] sm:$0xff] %v461
        %509 = vst [vmem:[%s226 + $0xc8] sm:$0xff] %v464
        %510 = vst [vmem:[%s226 + $0xd0] sm:$0xff] %v467
        %511 = vst [vmem:[%s226 + $0xd8] sm:$0xff] %v470
        %512 = vst [vmem:[%s226 + $0xe0] sm:$0xff] %v473
        %513 = vst [vmem:[%s226 + $0xe8] sm:$0xff] %v476
        %514 = vst [vmem:[%s226 + $0xf0] sm:$0xff] %v479
        %515 = vst [vmem:[%s226 + $0xf8] sm:$0xff] %v482
        %s516 = sand.u32 %s113, 1
        %s517 = scalar_lea.sflag [#allocation4], %s516
        %s518 = sand.u32 %s113, 1
        %s519 = smul.addr %s518, 256
        %s520 = scalar_lea.vmem [#allocation7], %s519
        // Predicated region
        $region41: #{tpu_custom_call.1} parent=31 // pred_check
          %p521 = pneg %p123
        $region42: #{tpu_custom_call.1} parent=31 // pred_check_branch
          %523 = sbr.rel (%p521) target = $region44
        $region43: #{tpu_custom_call.1} parent=31 // pred_region
          %s524 = smul.u32 16, %s26
          %526 = vsyncadd %s517, 0
          %s527 = smul.addr %s524, 2
          %s528 = smul.addr %s25, 32
          %s529 = sadd.s32 %s527, %s528
          %s530 = smul.addr %s529, 8
          %s531 = scalar_lea.hbm %s3, %s530
          %s532 = sshll.u32 %s520, 4
          %s533 = int_to_ptr.vmem [resolvable:$true] %s532
          %s534 = sshll.u32 %s531, 4
          %s535 = int_to_ptr.hbm [resolvable:$true] %s534
          %540 = dma.vmem_to_hbm [thread:$0]  %s533, 4096, %s535, %s517, 128, 128, 8
        $region44: #{tpu_custom_call.1} parent=31 // pred_fallthru
          _
      $region32: #{tpu_custom_call.1} parent=5 // pred_fallthru
        _
      %p541 = scmp.le.s32.totalorder 2, %s16
      // Predicated region
      $region45: #{tpu_custom_call.1} parent=5 // pred_check
        %p542 = pneg %p541
      $region46: #{tpu_custom_call.1} parent=5 // pred_check_branch
        %544 = sbr.rel (%p542) target = $region48
      $region47: #{tpu_custom_call.1} parent=5 // pred_region
        %s545 = ssub.s32 %s16, 2
        // Predicated region
        $region49: #{tpu_custom_call.1} parent=47 // pred_check
          %p546 = pneg %p129
        $region50: #{tpu_custom_call.1} parent=47 // pred_check_branch
          %548 = sbr.rel (%p546) target = $region52
        $region51: #{tpu_custom_call.1} parent=47 // pred_region
          %s549 = sand.u32 %s114, 1
          %s550 = scalar_lea.sflag [#allocation4], %s549
          %s551 = sand.u32 %s114, 1
          %s552 = smul.addr %s551, 256
          %s553 = scalar_lea.vmem [#allocation7], %s552
          %555 = dma.done %s550, 4096
        $region52: #{tpu_custom_call.1} parent=47 // pred_fallthru
          _
      $region48: #{tpu_custom_call.1} parent=5 // pred_fallthru
        _
    $region6: #{tpu_custom_call.1} parent=1 // loop_footer
      %s20 = sadd.s32 1, %s16
    $region7: #{tpu_custom_call.1} parent=1 // loop_footer_branch
      %15 = sbr.rel target = $region3
    $region8: #{tpu_custom_call.1} parent=1 // loop_exit
      _
    %556 = vsyncpa [#allocation3], 1
    %s557 = scalar_lea.sflag [#allocation3], 1
    %558 = vsyncpa %s557, 1
    %559 = vsyncpa [#allocation6], 1
    %560 = vsyncpa [#allocation4], 1
    %s561 = scalar_lea.sflag [#allocation4], 1
    %562 = vsyncpa %s561, 1

// kernel: tpu_custom_call.1
$region0: #{tpu_custom_call.1}
  #allocation0 [shape = 'u32[]', space=smem, size = 0x4, offset = 0x4, fixed_abs, tag = 'smem constant byte address 0x4 - core index']
  #allocation1 [shape = 'u32[72,128]{1,0:T(1,128)}', space=vmem, size = 0x9000, scoped, tag = 'internal scratch']
  %s0 = inlined_call_operand.hbm [shape: f32[2,16,16,36], index: 0, kind: input, shape index: {}]
  %s1 = inlined_call_operand.hbm [shape: f32[36,128], index: 1, kind: input, shape index: {}]
  %s2 = inlined_call_operand.vmem [shape: f32[1,128], index: 2, kind: input, shape index: {}]
  %s3 = inlined_call_operand.hbm [shape: f32[2,16,16,128], index: 3, kind: output, shape index: {}]
  %s4 = sld [smem:[#allocation0]]
  $region53: #{tpu_custom_call.1} parent=0
    _
  %s6 = ssub.s32 1, %s4
  %s7 = scalar_select 0, %s6, %s4
  $region1: #{tpu_custom_call.1} parent=0
    #allocation2 [shape = 'u8[262144]{0}', space=vmem, size = 0x40000, scoped, tag = 'input window, operand 0']
    #allocation3 [shape = 's32[2]{0}', space=sflag, size = 0x8, scoped, tag = 'scoped memory for tpu_custom_call.1']
    #allocation4 [shape = 's32[2]{0}', space=sflag, size = 0x8, scoped, tag = 'scoped memory for tpu_custom_call.1']
    #allocation5 [shape = 'u8[20480]{0}', space=vmem, size = 0x5000, scoped, tag = 'input window, operand 1, single buffered']
    #allocation6 [shape = 's32[1]{0}', space=sflag, size = 0x4, scoped, tag = 'scoped memory for tpu_custom_call.1']
    #allocation7 [shape = 'u8[262144]{0}', space=vmem, size = 0x40000, scoped, tag = 'output window, operand 0']
    %8 = vsyncpa [#allocation3], 0
    %s9 = scalar_lea.sflag [#allocation3], 1
    %10 = vsyncpa %s9, 0
    %11 = vsyncpa [#allocation6], 0
    %12 = vsyncpa [#allocation4], 0
    %s13 = scalar_lea.sflag [#allocation4], 1
    %14 = vsyncpa %s13, 0
    loop: start=0, step=1, limit=4
    $region2: #{tpu_custom_call.1} parent=1 // loop_pre_header
      _
    $region3: #{tpu_custom_call.1} parent=1 // loop_header
      %s16 = sphi 0, %s20
      %p17 = scmp.ge.s32.totalorder %s16, 4
      %s23 = sphi 0, %s35
      %s24 = sphi 0, %s31
      %s25 = sphi 0, %s23
      %s26 = sphi 0, %s24
      %s27 = sphi 0, %s25
      %s28 = sphi 0, %s26
      %s40 = sphi 0, %s42
      %s43 = sphi 0, %s40
      %s44 = sphi 0, %s43
      %s60 = sphi 0, %s44
      %s64 = sphi 0, %s64
      %s66 = sphi 0, %s64
      %s67 = sphi 0, %s66
      %s81 = sphi 0, %s67
      %s85 = sphi 0, %s85
      %s87 = sphi 0, %s85
      %s88 = sphi 0, %s87
      %s102 = sphi 0, %s88
      %s110 = sphi 0, %s112
      %s113 = sphi 0, %s110
      %s114 = sphi 0, %s113
      %s130 = sphi 0, %s114
    $region4: #{tpu_custom_call.1} parent=1 // loop_header_branch
      %19 = sbr.rel (%p17) target = $region8
    $region5: #{tpu_custom_call.1} parent=1 // loop_body
      %s21 = ssub.s32 %s16, 1
      %s22 = ssub.s32 %s16, 2
      %s29 = sadd.s32 1, %s24
      %p30 = scmp.ge.s32.totalorder %s29, 1
      %s31 = scalar_select %p30, 0, %s29
      %s32 = sadd.s32 1, %s23
      %s33 = scalar_select %p30, %s32, %s23
      %p34 = scmp.ge.s32.totalorder %s33, 2
      %s35 = scalar_select %p34, 0, %s33
      %s36 = ssub.s32 %s23, %s35
      %s37 = ssub.s32 %s24, %s31
      %s38 = sor.u32 %s36, %s37
      %p39 = scmp.eq.s32.totalorder %s38, 0
      %s41 = sadd.s32 %s40, 1
      %s42 = scalar_select %p39, %s40, %s41
      %p45 = pneg %p39
      %p46 = scmp.eq.s32.totalorder %s16, 1
      %p47 = por %p45, %p46
      %p48 = scmp.ne.s32.totalorder %s40, %s43
      %p49 = scmp.eq.s32.totalorder %s16, 0
      %p50 = por %p48, %p49
      %p51 = scmp.ne.s32.totalorder %s40, %s43
      %p52 = scmp.eq.s32.totalorder %s21, 1
      %p53 = por %p51, %p52
      %p54 = scmp.ne.s32.totalorder %s43, %s44
      %p55 = scmp.eq.s32.totalorder %s21, 0
      %p56 = por %p54, %p55
      %p57 = scmp.ne.s32.totalorder %s43, %s44
      %p58 = scmp.eq.s32.totalorder %s22, 1
      %p59 = por %p57, %p58
      %p61 = scmp.ne.s32.totalorder %s44, %s60
      %p62 = scmp.eq.s32.totalorder %s22, 0
      %p63 = por %p61, %p62
      %s65 = sadd.s32 %s64, 1
      %p68 = scmp.eq.s32.totalorder %s16, 1
      %p69 = scmp.ne.s32.totalorder %s64, %s66
      %p70 = scmp.eq.s32.totalorder %s16, 0
      %p71 = por %p69, %p70
      %p72 = scmp.ne.s32.totalorder %s64, %s66
      %p73 = scmp.eq.s32.totalorder %s21, 1
      %p74 = por %p72, %p73
      %p75 = scmp.ne.s32.totalorder %s66, %s67
      %p76 = scmp.eq.s32.totalorder %s21, 0
      %p77 = por %p75, %p76
      %p78 = scmp.ne.s32.totalorder %s66, %s67
      %p79 = scmp.eq.s32.totalorder %s22, 1
      %p80 = por %p78, %p79
      %p82 = scmp.ne.s32.totalorder %s67, %s81
      %p83 = scmp.eq.s32.totalorder %s22, 0
      %p84 = por %p82, %p83
      %s86 = sadd.s32 %s85, 1
      %p89 = scmp.eq.s32.totalorder %s16, 1
      %p90 = scmp.ne.s32.totalorder %s85, %s87
      %p91 = scmp.eq.s32.totalorder %s16, 0
      %p92 = por %p90, %p91
      %p93 = scmp.ne.s32.totalorder %s85, %s87
      %p94 = scmp.eq.s32.totalorder %s21, 1
      %p95 = por %p93, %p94
      %p96 = scmp.ne.s32.totalorder %s87, %s88
      %p97 = scmp.eq.s32.totalorder %s21, 0
      %p98 = por %p96, %p97
      %p99 = scmp.ne.s32.totalorder %s87, %s88
      %p100 = scmp.eq.s32.totalorder %s22, 1
      %p101 = por %p99, %p100
      %p103 = scmp.ne.s32.totalorder %s88, %s102
      %p104 = scmp.eq.s32.totalorder %s22, 0
      %p105 = por %p103, %p104
      %s106 = ssub.s32 %s23, %s35
      %s107 = ssub.s32 %s24, %s31
      %s108 = sor.u32 %s106, %s107
      %p109 = scmp.eq.s32.totalorder %s108, 0
      %s111 = sadd.s32 %s110, 1
      %s112 = scalar_select %p109, %s110, %s111
      %p115 = pneg %p109
      %p116 = scmp.eq.s32.totalorder %s16, 1
      %p117 = por %p115, %p116
      %p118 = scmp.ne.s32.totalorder %s110, %s113
      %p119 = scmp.eq.s32.totalorder %s16, 0
      %p120 = por %p118, %p119
      %p121 = scmp.ne.s32.totalorder %s110, %s113
      %p122 = scmp.eq.s32.totalorder %s21, 1
      %p123 = por %p121, %p122
      %p124 = scmp.ne.s32.totalorder %s113, %s114
      %p125 = scmp.eq.s32.totalorder %s21, 0
      %p126 = por %p124, %p125
      %p127 = scmp.ne.s32.totalorder %s113, %s114
      %p128 = scmp.eq.s32.totalorder %s22, 1
      %p129 = por %p127, %p128
      %p131 = scmp.ne.s32.totalorder %s114, %s130
      %p132 = scmp.eq.s32.totalorder %s22, 0
      %p133 = por %p131, %p132
      %p134 = scmp.le.s32.totalorder 1, %s16
      %p135 = scmp.lt.s32.totalorder %s16, 3
      %p136 = pnand %p134, %p135
      %p137 = pneg %p136
      // Predicated region
      $region9: #{tpu_custom_call.1} parent=5 // pred_check
        _
      $region10: #{tpu_custom_call.1} parent=5 // pred_check_branch
        %139 = sbr.rel (%p136) target = $region12
      $region11: #{tpu_custom_call.1} parent=5 // pred_region
        %s140 = ssub.s32 %s16, 1
        // Predicated region
        $region13: #{tpu_custom_call.1} parent=11 // pred_check
          %p141 = pneg %p77
        $region14: #{tpu_custom_call.1} parent=11 // pred_check_branch
          %143 = sbr.rel (%p141) target = $region16
        $region15: #{tpu_custom_call.1} parent=11 // pred_region
          %145 = vsyncadd [#allocation6], 0
          %s146 = sshll.u32 %s1, 4
          %s147 = int_to_ptr.hbm [resolvable:$true] %s146
          %s148 = sshll.u32 [#allocation5], 4
          %s149 = int_to_ptr.vmem [resolvable:$true] %s148
          %154 = dma.hbm_to_vmem [thread:$0]  %s147, 640, %s149, [#allocation6], 128, 128, 8
        $region16: #{tpu_custom_call.1} parent=11 // pred_fallthru
          _
        // Predicated region
        $region17: #{tpu_custom_call.1} parent=11 // pred_check
          %p155 = pneg %p98
        $region18: #{tpu_custom_call.1} parent=11 // pred_check_branch
          %157 = sbr.rel (%p155) target = $region20
        $region19: #{tpu_custom_call.1} parent=11 // pred_region
          _
        $region20: #{tpu_custom_call.1} parent=11 // pred_fallthru
          _
      $region12: #{tpu_custom_call.1} parent=5 // pred_fallthru
        _
      %p158 = scmp.lt.s32.totalorder %s16, 2
      // Predicated region
      $region21: #{tpu_custom_call.1} parent=5 // pred_check
        %p159 = pneg %p158
      $region22: #{tpu_custom_call.1} parent=5 // pred_check_branch
        %161 = sbr.rel (%p159) target = $region24
      $region23: #{tpu_custom_call.1} parent=5 // pred_region
        // Predicated region
        $region25: #{tpu_custom_call.1} parent=23 // pred_check
          %p162 = pneg %p50
        $region26: #{tpu_custom_call.1} parent=23 // pred_check_branch
          %164 = sbr.rel (%p162) target = $region28
        $region27: #{tpu_custom_call.1} parent=23 // pred_region
          %s165 = sand.u32 %s40, 1
          %s166 = scalar_lea.sflag [#allocation3], %s165
          %s167 = sand.u32 %s40, 1
          %s168 = smul.addr %s167, 256
          %s169 = scalar_lea.vmem [#allocation2], %s168
          %s170 = smul.u32 16, %s24
          %172 = vsyncadd %s166, 0
          %s173 = smul.addr %s170, 2
          %s174 = smul.addr %s23, 32
          %s175 = sadd.s32 %s173, %s174
          %s176 = smul.addr %s175, 8
          %s177 = scalar_lea.hbm %s0, %s176
          %s178 = sshll.u32 %s177, 4
          %s179 = int_to_ptr.hbm [resolvable:$true] %s178
          %s180 = sshll.u32 %s169, 4
          %s181 = int_to_ptr.vmem [resolvable:$true] %s180
          %186 = dma.hbm_to_vmem [thread:$0]  %s179, 4096, %s181, %s166, 128, 128, 8
        $region28: #{tpu_custom_call.1} parent=23 // pred_fallthru
          _
      $region24: #{tpu_custom_call.1} parent=5 // pred_fallthru
        _
      %p187 = scmp.le.s32.totalorder 1, %s16
      %p188 = scmp.lt.s32.totalorder %s16, 3
      %p189 = pnand %p187, %p188
      %p190 = pneg %p189
      // Predicated region
      $region29: #{tpu_custom_call.1} parent=5 // pred_check
        _
      $region30: #{tpu_custom_call.1} parent=5 // pred_check_branch
        %192 = sbr.rel (%p189) target = $region32
      $region31: #{tpu_custom_call.1} parent=5 // pred_region
        %s193 = ssub.s32 %s16, 1
        %s194 = sand.u32 %s43, 1
        %s195 = scalar_lea.sflag [#allocation3], %s194
        %s196 = sand.u32 %s43, 1
        %s197 = smul.addr %s196, 256
        %s198 = scalar_lea.vmem [#allocation2], %s197
        // Predicated region
        $region33: #{tpu_custom_call.1} parent=31 // pred_check
          %p199 = pneg %p56
        $region34: #{tpu_custom_call.1} parent=31 // pred_check_branch
          %201 = sbr.rel (%p199) target = $region36
        $region35: #{tpu_custom_call.1} parent=31 // pred_region
          %203 = dma.done %s195, 4096
        $region36: #{tpu_custom_call.1} parent=31 // pred_fallthru
          _
        // Predicated region
        $region37: #{tpu_custom_call.1} parent=31 // pred_check
          %p204 = pneg %p77
        $region38: #{tpu_custom_call.1} parent=31 // pred_check_branch
          %206 = sbr.rel (%p204) target = $region40
        $region39: #{tpu_custom_call.1} parent=31 // pred_region
          %208 = dma.done [#allocation6], 640
        $region40: #{tpu_custom_call.1} parent=31 // pred_fallthru
          _
        %s209 = sand.u32 %s43, 1
        %s210 = scalar_lea.sflag [#allocation3], %s209
        %s211 = sand.u32 %s43, 1
        %s212 = smul.addr %s211, 256
        %s213 = scalar_lea.vmem [#allocation2], %s212
        %p214 = pneg %p56
        %p215 = pneg %p53
        %p216 = pneg %p77
        %p217 = pneg %p74
        %p218 = pneg %p98
        %p219 = pneg %p95
        %p220 = pneg %p126
        %p221 = pneg %p123
        %s222 = sand.u32 %s113, 1
        %s223 = scalar_lea.sflag [#allocation4], %s222
        %s224 = sand.u32 %s113, 1
        %s225 = smul.addr %s224, 256
        %s226 = scalar_lea.vmem [#allocation7], %s225
        %s227 = smul.u32 16, %s26
        %s228 = smul.u32 16, %s26
        %v229 = vld [vmem:[%s198] sm:$0xff]
        %v230 = vld [vmem:[%s198 + $0x8] sm:$0xff]
        %v231 = vld [vmem:[%s198 + $0x10] sm:$0xff]
        %v232 = vld [vmem:[%s198 + $0x18] sm:$0xff]
        %v233 = vld [vmem:[%s198 + $0x20] sm:$0xff]
        %v234 = vld [vmem:[%s198 + $0x28] sm:$0xff]
        %v235 = vld [vmem:[%s198 + $0x30] sm:$0xff]
        %v236 = vld [vmem:[%s198 + $0x38] sm:$0xff]
        %v237 = vld [vmem:[%s198 + $0x40] sm:$0xff]
        %v238 = vld [vmem:[%s198 + $0x48] sm:$0xff]
        %v239 = vld [vmem:[%s198 + $0x50] sm:$0xff]
        %v240 = vld [vmem:[%s198 + $0x58] sm:$0xff]
        %v241 = vld [vmem:[%s198 + $0x60] sm:$0xff]
        %v242 = vld [vmem:[%s198 + $0x68] sm:$0xff]
        %v243 = vld [vmem:[%s198 + $0x70] sm:$0xff]
        %v244 = vld [vmem:[%s198 + $0x78] sm:$0xff]
        %v245 = vld [vmem:[%s198 + $0x80] sm:$0xff]
        %v246 = vld [vmem:[%s198 + $0x88] sm:$0xff]
        %v247 = vld [vmem:[%s198 + $0x90] sm:$0xff]
        %v248 = vld [vmem:[%s198 + $0x98] sm:$0xff]
        %v249 = vld [vmem:[%s198 + $0xa0] sm:$0xff]
        %v250 = vld [vmem:[%s198 + $0xa8] sm:$0xff]
        %v251 = vld [vmem:[%s198 + $0xb0] sm:$0xff]
        %v252 = vld [vmem:[%s198 + $0xb8] sm:$0xff]
        %v253 = vld [vmem:[%s198 + $0xc0] sm:$0xff]
        %v254 = vld [vmem:[%s198 + $0xc8] sm:$0xff]
        %v255 = vld [vmem:[%s198 + $0xd0] sm:$0xff]
        %v256 = vld [vmem:[%s198 + $0xd8] sm:$0xff]
        %v257 = vld [vmem:[%s198 + $0xe0] sm:$0xff]
        %v258 = vld [vmem:[%s198 + $0xe8] sm:$0xff]
        %v259 = vld [vmem:[%s198 + $0xf0] sm:$0xff]
        %v260 = vld [vmem:[%s198 + $0xf8] sm:$0xff]
        %v261 = vld [vmem:[#allocation5] sm:$0xff]
        %v262 = vld [vmem:[#allocation5 + $0x8] sm:$0xff]
        %v263 = vld [vmem:[#allocation5 + $0x10] sm:$0xff]
        %v264 = vld [vmem:[#allocation5 + $0x18] sm:$0xff]
        %v265 = vld [vmem:[#allocation5 + $0x20] sm:$0xf]
        %v266 = vld [vmem:[%s2] sm:$0x1]
        %v268 = vperm.slane %v266, 0
        %vm270 = vcmask 293888
        %v272 = vsel %vm270, %v229, 0
        %v275 = vsel %vm270, %v230, 0
        %v278 = vsel %vm270, %v231, 0
        %v281 = vsel %vm270, %v232, 0
        %v284 = vsel %vm270, %v233, 0
        %v287 = vsel %vm270, %v234, 0
        %v290 = vsel %vm270, %v235, 0
        %v293 = vsel %vm270, %v236, 0
        %v296 = vsel %vm270, %v237, 0
        %v299 = vsel %vm270, %v238, 0
        %v302 = vsel %vm270, %v239, 0
        %v305 = vsel %vm270, %v240, 0
        %v308 = vsel %vm270, %v241, 0
        %v311 = vsel %vm270, %v242, 0
        %v314 = vsel %vm270, %v243, 0
        %v317 = vsel %vm270, %v244, 0
        %v320 = vsel %vm270, %v245, 0
        %v323 = vsel %vm270, %v246, 0
        %v326 = vsel %vm270, %v247, 0
        %v329 = vsel %vm270, %v248, 0
        %v332 = vsel %vm270, %v249, 0
        %v335 = vsel %vm270, %v250, 0
        %v338 = vsel %vm270, %v251, 0
        %v341 = vsel %vm270, %v252, 0
        %v344 = vsel %vm270, %v253, 0
        %v347 = vsel %vm270, %v254, 0
        %v350 = vsel %vm270, %v255, 0
        %v353 = vsel %vm270, %v256, 0
        %v356 = vsel %vm270, %v257, 0
        %v359 = vsel %vm270, %v258, 0
        %v362 = vsel %vm270, %v259, 0
        %v365 = vsel %vm270, %v260, 0
        %vm367 = vcmask 1043456
        %v369 = vsel %vm367, %v265, 0
        %371 = vmatpush.msra.mxu0 0.0
        %372 = vmatpush.msra.mxu0 0.0
        %373 = vmatpush.msra.mxu0 0.0
        %374 = vmatpush.msra.mxu0 0.0
        %375 = vmatpush.msra.mxu0 0.0
        %376 = vmatpush.msra.mxu0 0.0
        %377 = vmatpush.msra.mxu0 0.0
        %378 = vmatpush.msra.mxu0 0.0
        %379 = vmatpush.msra.mxu0 0.0
        %380 = vmatpush.msra.mxu0 0.0
        %381 = vmatpush.msra.mxu0 0.0
        %382 = vmatpush.msra.mxu0 %v369
        %383 = vmatpush.msra.mxu0 %v264
        %384 = vmatpush.msra.mxu0 %v263
        %385 = vmatpush.msra.mxu0 %v262
        %386 = vmatpush.msra.mxu0 %v261
        %387 = vmatmul.f32.gmra.mxu0 %v272
        %v388 = vpop.f32.mrf.mxu0
        %v389 = vadd.f32 %v268, %v388
        %390 = vmatmul.f32.gmra.mxu0 %v275
        %v391 = vpop.f32.mrf.mxu0
        %v392 = vadd.f32 %v268, %v391
        %393 = vmatmul.f32.gmra.mxu0 %v278
        %v394 = vpop.f32.mrf.mxu0
        %v395 = vadd.f32 %v268, %v394
        %396 = vmatmul.f32.gmra.mxu0 %v281
        %v397 = vpop.f32.mrf.mxu0
        %v398 = vadd.f32 %v268, %v397
        %399 = vmatmul.f32.gmra.mxu0 %v284
        %v400 = vpop.f32.mrf.mxu0
        %v401 = vadd.f32 %v268, %v400
        %402 = vmatmul.f32.gmra.mxu0 %v287
        %v403 = vpop.f32.mrf.mxu0
        %v404 = vadd.f32 %v268, %v403
        %405 = vmatmul.f32.gmra.mxu0 %v290
        %v406 = vpop.f32.mrf.mxu0
        %v407 = vadd.f32 %v268, %v406
        %408 = vmatmul.f32.gmra.mxu0 %v293
        %v409 = vpop.f32.mrf.mxu0
        %v410 = vadd.f32 %v268, %v409
        %411 = vmatmul.f32.gmra.mxu0 %v296
        %v412 = vpop.f32.mrf.mxu0
        %v413 = vadd.f32 %v268, %v412
        %414 = vmatmul.f32.gmra.mxu0 %v299
        %v415 = vpop.f32.mrf.mxu0
        %v416 = vadd.f32 %v268, %v415
        %417 = vmatmul.f32.gmra.mxu0 %v302
        %v418 = vpop.f32.mrf.mxu0
        %v419 = vadd.f32 %v268, %v418
        %420 = vmatmul.f32.gmra.mxu0 %v305
        %v421 = vpop.f32.mrf.mxu0
        %v422 = vadd.f32 %v268, %v421
        %423 = vmatmul.f32.gmra.mxu0 %v308
        %v424 = vpop.f32.mrf.mxu0
        %v425 = vadd.f32 %v268, %v424
        %426 = vmatmul.f32.gmra.mxu0 %v311
        %v427 = vpop.f32.mrf.mxu0
        %v428 = vadd.f32 %v268, %v427
        %429 = vmatmul.f32.gmra.mxu0 %v314
        %v430 = vpop.f32.mrf.mxu0
        %v431 = vadd.f32 %v268, %v430
        %432 = vmatmul.f32.gmra.mxu0 %v317
        %v433 = vpop.f32.mrf.mxu0
        %v434 = vadd.f32 %v268, %v433
        %435 = vmatmul.f32.gmra.mxu0 %v320
        %v436 = vpop.f32.mrf.mxu0
        %v437 = vadd.f32 %v268, %v436
        %438 = vmatmul.f32.gmra.mxu0 %v323
        %v439 = vpop.f32.mrf.mxu0
        %v440 = vadd.f32 %v268, %v439
        %441 = vmatmul.f32.gmra.mxu0 %v326
        %v442 = vpop.f32.mrf.mxu0
        %v443 = vadd.f32 %v268, %v442
        %444 = vmatmul.f32.gmra.mxu0 %v329
        %v445 = vpop.f32.mrf.mxu0
        %v446 = vadd.f32 %v268, %v445
        %447 = vmatmul.f32.gmra.mxu0 %v332
        %v448 = vpop.f32.mrf.mxu0
        %v449 = vadd.f32 %v268, %v448
        %450 = vmatmul.f32.gmra.mxu0 %v335
        %v451 = vpop.f32.mrf.mxu0
        %v452 = vadd.f32 %v268, %v451
        %453 = vmatmul.f32.gmra.mxu0 %v338
        %v454 = vpop.f32.mrf.mxu0
        %v455 = vadd.f32 %v268, %v454
        %456 = vmatmul.f32.gmra.mxu0 %v341
        %v457 = vpop.f32.mrf.mxu0
        %v458 = vadd.f32 %v268, %v457
        %459 = vmatmul.f32.gmra.mxu0 %v344
        %v460 = vpop.f32.mrf.mxu0
        %v461 = vadd.f32 %v268, %v460
        %462 = vmatmul.f32.gmra.mxu0 %v347
        %v463 = vpop.f32.mrf.mxu0
        %v464 = vadd.f32 %v268, %v463
        %465 = vmatmul.f32.gmra.mxu0 %v350
        %v466 = vpop.f32.mrf.mxu0
        %v467 = vadd.f32 %v268, %v466
        %468 = vmatmul.f32.gmra.mxu0 %v353
        %v469 = vpop.f32.mrf.mxu0
        %v470 = vadd.f32 %v268, %v469
        %471 = vmatmul.f32.gmra.mxu0 %v356
        %v472 = vpop.f32.mrf.mxu0
        %v473 = vadd.f32 %v268, %v472
        %474 = vmatmul.f32.gmra.mxu0 %v359
        %v475 = vpop.f32.mrf.mxu0
        %v476 = vadd.f32 %v268, %v475
        %477 = vmatmul.f32.gmra.mxu0 %v362
        %v478 = vpop.f32.mrf.mxu0
        %v479 = vadd.f32 %v268, %v478
        %480 = vmatmul.f32.gmra.mxu0 %v365
        %v481 = vpop.f32.mrf.mxu0
        %v482 = vadd.f32 %v268, %v481
        %483 = vdwg.mxu0
        %484 = vst [vmem:[%s226] sm:$0xff] %v389
        %485 = vst [vmem:[%s226 + $0x8] sm:$0xff] %v392
        %486 = vst [vmem:[%s226 + $0x10] sm:$0xff] %v395
        %487 = vst [vmem:[%s226 + $0x18] sm:$0xff] %v398
        %488 = vst [vmem:[%s226 + $0x20] sm:$0xff] %v401
        %489 = vst [vmem:[%s226 + $0x28] sm:$0xff] %v404
        %490 = vst [vmem:[%s226 + $0x30] sm:$0xff] %v407
        %491 = vst [vmem:[%s226 + $0x38] sm:$0xff] %v410
        %492 = vst [vmem:[%s226 + $0x40] sm:$0xff] %v413
        %493 = vst [vmem:[%s226 + $0x48] sm:$0xff] %v416
        %494 = vst [vmem:[%s226 + $0x50] sm:$0xff] %v419
        %495 = vst [vmem:[%s226 + $0x58] sm:$0xff] %v422
        %496 = vst [vmem:[%s226 + $0x60] sm:$0xff] %v425
        %497 = vst [vmem:[%s226 + $0x68] sm:$0xff] %v428
        %498 = vst [vmem:[%s226 + $0x70] sm:$0xff] %v431
        %499 = vst [vmem:[%s226 + $0x78] sm:$0xff] %v434
        %500 = vst [vmem:[%s226 + $0x80] sm:$0xff] %v437
        %501 = vst [vmem:[%s226 + $0x88] sm:$0xff] %v440
        %502 = vst [vmem:[%s226 + $0x90] sm:$0xff] %v443
        %503 = vst [vmem:[%s226 + $0x98] sm:$0xff] %v446
        %504 = vst [vmem:[%s226 + $0xa0] sm:$0xff] %v449
        %505 = vst [vmem:[%s226 + $0xa8] sm:$0xff] %v452
        %506 = vst [vmem:[%s226 + $0xb0] sm:$0xff] %v455
        %507 = vst [vmem:[%s226 + $0xb8] sm:$0xff] %v458
        %508 = vst [vmem:[%s226 + $0xc0] sm:$0xff] %v461
        %509 = vst [vmem:[%s226 + $0xc8] sm:$0xff] %v464
        %510 = vst [vmem:[%s226 + $0xd0] sm:$0xff] %v467
        %511 = vst [vmem:[%s226 + $0xd8] sm:$0xff] %v470
        %512 = vst [vmem:[%s226 + $0xe0] sm:$0xff] %v473
        %513 = vst [vmem:[%s226 + $0xe8] sm:$0xff] %v476
        %514 = vst [vmem:[%s226 + $0xf0] sm:$0xff] %v479
        %515 = vst [vmem:[%s226 + $0xf8] sm:$0xff] %v482
        %s516 = sand.u32 %s113, 1
        %s517 = scalar_lea.sflag [#allocation4], %s516
        %s518 = sand.u32 %s113, 1
        %s519 = smul.addr %s518, 256
        %s520 = scalar_lea.vmem [#allocation7], %s519
        // Predicated region
        $region41: #{tpu_custom_call.1} parent=31 // pred_check
          %p521 = pneg %p123
        $region42: #{tpu_custom_call.1} parent=31 // pred_check_branch
          %523 = sbr.rel (%p521) target = $region44
        $region43: #{tpu_custom_call.1} parent=31 // pred_region
          %s524 = smul.u32 16, %s26
          %526 = vsyncadd %s517, 0
          %s527 = smul.addr %s524, 2
          %s528 = smul.addr %s25, 32
          %s529 = sadd.s32 %s527, %s528
          %s530 = smul.addr %s529, 8
          %s531 = scalar_lea.hbm %s3, %s530
          %s532 = sshll.u32 %s520, 4
          %s533 = int_to_ptr.vmem [resolvable:$true] %s532
          %s534 = sshll.u32 %s531, 4
          %s535 = int_to_ptr.hbm [resolvable:$true] %s534
          %540 = dma.vmem_to_hbm [thread:$0]  %s533, 4096, %s535, %s517, 128, 128, 8
        $region44: #{tpu_custom_call.1} parent=31 // pred_fallthru
          _
      $region32: #{tpu_custom_call.1} parent=5 // pred_fallthru
        _
      %p541 = scmp.le.s32.totalorder 2, %s16
      // Predicated region
      $region45: #{tpu_custom_call.1} parent=5 // pred_check
        %p542 = pneg %p541
      $region46: #{tpu_custom_call.1} parent=5 // pred_check_branch
        %544 = sbr.rel (%p542) target = $region48
      $region47: #{tpu_custom_call.1} parent=5 // pred_region
        %s545 = ssub.s32 %s16, 2
        // Predicated region
        $region49: #{tpu_custom_call.1} parent=47 // pred_check
          %p546 = pneg %p129
        $region50: #{tpu_custom_call.1} parent=47 // pred_check_branch
          %548 = sbr.rel (%p546) target = $region52
        $region51: #{tpu_custom_call.1} parent=47 // pred_region
          %s549 = sand.u32 %s114, 1
          %s550 = scalar_lea.sflag [#allocation4], %s549
          %s551 = sand.u32 %s114, 1
          %s552 = smul.addr %s551, 256
          %s553 = scalar_lea.vmem [#allocation7], %s552
          %555 = dma.done %s550, 4096
        $region52: #{tpu_custom_call.1} parent=47 // pred_fallthru
          _
      $region48: #{tpu_custom_call.1} parent=5 // pred_fallthru
        _
    $region6: #{tpu_custom_call.1} parent=1 // loop_footer
      %s20 = sadd.s32 1, %s16
    $region7: #{tpu_custom_call.1} parent=1 // loop_footer_branch
      %15 = sbr.rel target = $region3
    $region8: #{tpu_custom_call.1} parent=1 // loop_exit
      _
    %556 = vsyncpa [#allocation3], 1
    %s557 = scalar_lea.sflag [#allocation3], 1
    %558 = vsyncpa %s557, 1
    %559 = vsyncpa [#allocation6], 1
    %560 = vsyncpa [#allocation4], 1
    %s561 = scalar_lea.sflag [#allocation4], 1
    %562 = vsyncpa %s561, 1

</llo_original>
